<compile_context>
chip_gen: v5e
topology: v5e:2x2
jax: 0.10.0
libtpu: 0.0.40
codegen_flags: <defaults>
</compile_context>

<pallas_src>
import functools

import jax
import jax.numpy as jnp
from jax.experimental import pallas as pl
from jax.experimental.pallas import tpu as pltpu


def _as_2d(a):
    if a.ndim == 0:
        return a.reshape(1, 1)
    if a.ndim == 1:
        return a.reshape(1, -1)
    return a.reshape(a.shape[0], -1)


def _loss_vae_kernel(recon_ref, x_ref, mu_ref, lv_ref, out_ref, acc_ref,
                     *, d_total, tile_d, lane_group, n_groups, tiles_per_core,
                     need_mask):
    p = pl.program_id(0)          # core-split axis ("parallel")
    t = pl.program_id(1)          # streaming/reduction axis ("arbitrary")

    @pl.when(t == 0)
    def _():
        acc_ref[...] = jnp.zeros_like(acc_ref)

    # Global (unclamped) column offset of this tile.
    col0 = (p * tiles_per_core + t) * tile_d

    # Fold the tile's lane groups element-wise into an (M, lane_group) partial
    # sum: pure VPU work (diff, square, add), no cross-lane reduce per tile.
    part = None
    for j in range(n_groups):
        sl = pl.ds(j * lane_group, lane_group)
        r = recon_ref[:, sl].astype(jnp.float32)
        xx = x_ref[:, sl].astype(jnp.float32)
        d = r - xx
        sq = d * d
        if need_mask:
            lanes = jax.lax.broadcasted_iota(jnp.int32, (1, lane_group), 1)
            in_bounds = (col0 + j * lane_group + lanes) < d_total
            sq = jnp.where(in_bounds, sq, 0.0)
        part = sq if part is None else part + sq
    acc_ref[...] += part

    # Finalize once per core: single cross-lane reduce + KLD + scalar write.
    @pl.when(t == pl.num_programs(1) - 1)
    def _():
        mse_part = jnp.sum(acc_ref[...])
        mu = mu_ref[...].astype(jnp.float32)
        lv = lv_ref[...].astype(jnp.float32)
        kld = -0.5 * jnp.sum(1.0 + lv - mu * mu - jnp.exp(lv))
        # Only core 0 contributes the KLD term (it is added exactly once).
        val = mse_part + jnp.where(p == 0, kld, 0.0)
        out_ref[...] = jnp.broadcast_to(val, out_ref.shape)


def loss_vae(recon_x, x, mu, log_var):
    """Pallas implementation of Loss_VAE.forward. Returns a scalar float32."""
    assert recon_x.shape == x.shape
    assert mu.shape == log_var.shape

    recon2d = _as_2d(recon_x)     # free view: (B, C*H*W)
    x2d = _as_2d(x)
    mu2d = _as_2d(mu)
    lv2d = _as_2d(log_var)

    m, d_total = recon2d.shape
    itemsize = jnp.dtype(recon2d.dtype).itemsize

    LANES = 128
    TILE_BYTES = 2 * 1024 * 1024          # per-input tile (2 bufs x 2 inputs ~ 8 MiB VMEM)

    if d_total <= LANES:
        tile_d = d_total                   # full (tiny) width, single tile
    else:
        td = (TILE_BYTES // max(m * itemsize, 1)) // LANES * LANES
        td = max(td, LANES)
        d_padded = pl.cdiv(d_total, LANES) * LANES
        tile_d = min(td, d_padded)

    n_tiles = pl.cdiv(d_total, tile_d)

    # Split the column range across TensorCores (2 on v7x; harmless serial
    # loop on single-TC v5e/v6e).
    NUM_CORES = 2
    p_split = NUM_CORES if n_tiles >= NUM_CORES else 1
    tiles_per_core = pl.cdiv(n_tiles, p_split)

    lane_group = LANES if tile_d % LANES == 0 else tile_d
    n_groups = tile_d // lane_group

    # Mask needed iff the (p, t) grid over-covers the column range.
    need_mask = (p_split * tiles_per_core * tile_d) != d_total

    def col_block(p, t):
        idx = p * tiles_per_core + t
        if p_split * tiles_per_core != n_tiles:
            idx = jnp.minimum(idx, n_tiles - 1)   # duplicate last tile; masked to 0 in-kernel
        return (0, idx)

    kernel = functools.partial(
        _loss_vae_kernel,
        d_total=d_total,
        tile_d=tile_d,
        lane_group=lane_group,
        n_groups=n_groups,
        tiles_per_core=tiles_per_core,
        need_mask=need_mask,
    )

    partials = pl.pallas_call(
        kernel,
        out_shape=jax.ShapeDtypeStruct((p_split, LANES), jnp.float32),
        grid=(p_split, tiles_per_core),
        in_specs=[
            pl.BlockSpec((m, tile_d), col_block),              # recon_x (streamed)
            pl.BlockSpec((m, tile_d), col_block),              # x       (streamed)
            pl.BlockSpec(mu2d.shape, lambda p, t: (0, 0)),     # mu      (resident)
            pl.BlockSpec(lv2d.shape, lambda p, t: (0, 0)),     # log_var (resident)
        ],
        out_specs=pl.BlockSpec((1, LANES), lambda p, t: (p, 0)),
        scratch_shapes=[pltpu.VMEM((m, lane_group), jnp.float32)],
        compiler_params=pltpu.CompilerParams(
            dimension_semantics=("parallel", "arbitrary"),
        ),
    )(recon2d, x2d, mu2d, lv2d)

    # Sum the tiny per-core partials (KLD was folded into core 0's partial).
    return jnp.sum(partials[:, 0])


def loss_vae_ref(recon_x, x, mu, log_var):
    """Pure-JAX reference matching the PyTorch module."""
    r = recon_x.astype(jnp.float32)
    xx = x.astype(jnp.float32)
    mu = mu.astype(jnp.float32)
    lv = log_var.astype(jnp.float32)
    mse = jnp.sum((r - xx) ** 2)
    kld = -0.5 * jnp.sum(1.0 + lv - mu**2 - jnp.exp(lv))
    return mse + kld


if __name__ == "__main__":
    key = jax.random.PRNGKey(0)
    k1, k2, k3, k4 = jax.random.split(key, 4)

    # Small shapes consistent with a VAE forward: images NCHW, latent (B, Z).
    B, C, H, W = 2, 4, 16, 16
    Z = 32
    recon_x = jax.random.normal(k1, (B, C, H, W), jnp.float32)
    x = jax.random.normal(k2, (B, C, H, W), jnp.float32)
    mu = jax.random.normal(k3, (B, Z), jnp.float32)
    log_var = 0.1 * jax.random.normal(k4, (B, Z), jnp.float32)

    out = loss_vae(recon_x, x, mu, log_var)
    jax.block_until_ready(out)

    ref = loss_vae_ref(recon_x, x, mu, log_var)
    assert jnp.allclose(out, ref, rtol=2e-5, atol=1e-3), (out, ref)

    print("KERNEL_OK")
</pallas_src>

<mosaic_0001>
module attributes {stable_mosaic.version = 11 : i64} {
  func.func @_loss_vae_kernel(%arg0: i32, %arg1: i32, %arg2: memref<2x1024xf32, #tpu.memory_space<vmem>>, %arg3: memref<2x1024xf32, #tpu.memory_space<vmem>>, %arg4: memref<2x32xf32, #tpu.memory_space<vmem>>, %arg5: memref<2x32xf32, #tpu.memory_space<vmem>>, %arg6: memref<1x128xf32, #tpu.memory_space<vmem>>, %arg7: memref<2x128xf32, #tpu.memory_space<vmem>>) attributes {dimension_semantics = [#tpu.dimension_semantics<parallel>, #tpu.dimension_semantics<arbitrary>], iteration_bounds = array<i64: 1, 1>, scalar_prefetch = 0 : i64, scratch_operands = 1 : i64, tpu.core_type = #tpu.core_type<tc>, window_params = [{transform_indices = @transform_0, window_bounds = array<i64: 2, 1024>}, {transform_indices = @transform_1, window_bounds = array<i64: 2, 1024>}, {pipeline_mode = #tpu.pipeline_mode<synchronous>, transform_indices = @transform_2, window_bounds = array<i64: 2, 32>}, {pipeline_mode = #tpu.pipeline_mode<synchronous>, transform_indices = @transform_3, window_bounds = array<i64: 2, 32>}, {transform_indices = @transform_4, window_bounds = array<i64: 1, 128>}]} {
    %c0_i32 = arith.constant 0 : i32
    %0 = arith.cmpi eq, %arg1, %c0_i32 : i32
    %1 = arith.extui %0 : i1 to i32
    %c0_i32_0 = arith.constant 0 : i32
    %2 = arith.cmpi ne, %1, %c0_i32_0 : i32
    scf.if %2 {
      %cst = arith.constant 0.000000e+00 : f32
      %48 = vector.broadcast %cst : f32 to vector<2x128xf32>
      %c0_31 = arith.constant 0 : index
      %c0_32 = arith.constant 0 : index
      %49 = vector.load %arg7[%c0_31, %c0_32] : memref<2x128xf32, #tpu.memory_space<vmem>>, vector<2x128xf32>
      tpu.vector_store %arg7[%c0_31, %c0_32], %48 {strides = array<i32>} : memref<2x128xf32, #tpu.memory_space<vmem>>, vector<2x128xf32>,
    } else {
    }
    %c0 = arith.constant 0 : index
    %c0_1 = arith.constant 0 : index
    %3 = vector.load %arg2[%c0, %c0_1] : memref<2x1024xf32, #tpu.memory_space<vmem>>, vector<2x128xf32>
    %c0_2 = arith.constant 0 : index
    %c0_3 = arith.constant 0 : index
    %4 = vector.load %arg3[%c0_2, %c0_3] : memref<2x1024xf32, #tpu.memory_space<vmem>>, vector<2x128xf32>
    %5 = arith.subf %3, %4 : vector<2x128xf32>
    %6 = arith.mulf %5, %5 : vector<2x128xf32>
    %c0_4 = arith.constant 0 : index
    %c128 = arith.constant 128 : index
    %7 = vector.load %arg2[%c0_4, %c128] : memref<2x1024xf32, #tpu.memory_space<vmem>>, vector<2x128xf32>
    %c0_5 = arith.constant 0 : index
    %c128_6 = arith.constant 128 : index
    %8 = vector.load %arg3[%c0_5, %c128_6] : memref<2x1024xf32, #tpu.memory_space<vmem>>, vector<2x128xf32>
    %9 = arith.subf %7, %8 : vector<2x128xf32>
    %10 = arith.mulf %9, %9 : vector<2x128xf32>
    %11 = arith.addf %6, %10 : vector<2x128xf32>
    %c0_7 = arith.constant 0 : index
    %c256 = arith.constant 256 : index
    %12 = vector.load %arg2[%c0_7, %c256] : memref<2x1024xf32, #tpu.memory_space<vmem>>, vector<2x128xf32>
    %c0_8 = arith.constant 0 : index
    %c256_9 = arith.constant 256 : index
    %13 = vector.load %arg3[%c0_8, %c256_9] : memref<2x1024xf32, #tpu.memory_space<vmem>>, vector<2x128xf32>
    %14 = arith.subf %12, %13 : vector<2x128xf32>
    %15 = arith.mulf %14, %14 : vector<2x128xf32>
    %16 = arith.addf %11, %15 : vector<2x128xf32>
    %c0_10 = arith.constant 0 : index
    %c384 = arith.constant 384 : index
    %17 = vector.load %arg2[%c0_10, %c384] : memref<2x1024xf32, #tpu.memory_space<vmem>>, vector<2x128xf32>
    %c0_11 = arith.constant 0 : index
    %c384_12 = arith.constant 384 : index
    %18 = vector.load %arg3[%c0_11, %c384_12] : memref<2x1024xf32, #tpu.memory_space<vmem>>, vector<2x128xf32>
    %19 = arith.subf %17, %18 : vector<2x128xf32>
    %20 = arith.mulf %19, %19 : vector<2x128xf32>
    %21 = arith.addf %16, %20 : vector<2x128xf32>
    %c0_13 = arith.constant 0 : index
    %c512 = arith.constant 512 : index
    %22 = vector.load %arg2[%c0_13, %c512] : memref<2x1024xf32, #tpu.memory_space<vmem>>, vector<2x128xf32>
    %c0_14 = arith.constant 0 : index
    %c512_15 = arith.constant 512 : index
    %23 = vector.load %arg3[%c0_14, %c512_15] : memref<2x1024xf32, #tpu.memory_space<vmem>>, vector<2x128xf32>
    %24 = arith.subf %22, %23 : vector<2x128xf32>
    %25 = arith.mulf %24, %24 : vector<2x128xf32>
    %26 = arith.addf %21, %25 : vector<2x128xf32>
    %c0_16 = arith.constant 0 : index
    %c640 = arith.constant 640 : index
    %27 = vector.load %arg2[%c0_16, %c640] : memref<2x1024xf32, #tpu.memory_space<vmem>>, vector<2x128xf32>
    %c0_17 = arith.constant 0 : index
    %c640_18 = arith.constant 640 : index
    %28 = vector.load %arg3[%c0_17, %c640_18] : memref<2x1024xf32, #tpu.memory_space<vmem>>, vector<2x128xf32>
    %29 = arith.subf %27, %28 : vector<2x128xf32>
    %30 = arith.mulf %29, %29 : vector<2x128xf32>
    %31 = arith.addf %26, %30 : vector<2x128xf32>
    %c0_19 = arith.constant 0 : index
    %c768 = arith.constant 768 : index
    %32 = vector.load %arg2[%c0_19, %c768] : memref<2x1024xf32, #tpu.memory_space<vmem>>, vector<2x128xf32>
    %c0_20 = arith.constant 0 : index
    %c768_21 = arith.constant 768 : index
    %33 = vector.load %arg3[%c0_20, %c768_21] : memref<2x1024xf32, #tpu.memory_space<vmem>>, vector<2x128xf32>
    %34 = arith.subf %32, %33 : vector<2x128xf32>
    %35 = arith.mulf %34, %34 : vector<2x128xf32>
    %36 = arith.addf %31, %35 : vector<2x128xf32>
    %c0_22 = arith.constant 0 : index
    %c896 = arith.constant 896 : index
    %37 = vector.load %arg2[%c0_22, %c896] : memref<2x1024xf32, #tpu.memory_space<vmem>>, vector<2x128xf32>
    %c0_23 = arith.constant 0 : index
    %c896_24 = arith.constant 896 : index
    %38 = vector.load %arg3[%c0_23, %c896_24] : memref<2x1024xf32, #tpu.memory_space<vmem>>, vector<2x128xf32>
    %39 = arith.subf %37, %38 : vector<2x128xf32>
    %40 = arith.mulf %39, %39 : vector<2x128xf32>
    %41 = arith.addf %36, %40 : vector<2x128xf32>
    %c0_25 = arith.constant 0 : index
    %c0_26 = arith.constant 0 : index
    %42 = vector.load %arg7[%c0_25, %c0_26] : memref<2x128xf32, #tpu.memory_space<vmem>>, vector<2x128xf32>
    %43 = arith.addf %42, %41 : vector<2x128xf32>
    %c0_27 = arith.constant 0 : index
    %c0_28 = arith.constant 0 : index
    %44 = vector.load %arg7[%c0_27, %c0_28] : memref<2x128xf32, #tpu.memory_space<vmem>>, vector<2x128xf32>
    tpu.vector_store %arg7[%c0_27, %c0_28], %43 {strides = array<i32>} : memref<2x128xf32, #tpu.memory_space<vmem>>, vector<2x128xf32>,
    %c0_i32_29 = arith.constant 0 : i32
    %45 = arith.cmpi eq, %arg1, %c0_i32_29 : i32
    %46 = arith.extui %45 : i1 to i32
    %c0_i32_30 = arith.constant 0 : i32
    %47 = arith.cmpi ne, %46, %c0_i32_30 : i32
    scf.if %47 {
      %c0_31 = arith.constant 0 : index
      %c0_32 = arith.constant 0 : index
      %48 = vector.load %arg7[%c0_31, %c0_32] : memref<2x128xf32, #tpu.memory_space<vmem>>, vector<2x128xf32>
      %49 = vector.shape_cast %48 : vector<2x128xf32> to vector<1x2x128xf32>
      %cst = arith.constant dense<0.000000e+00> : vector<1xf32>
      %50 = vector.multi_reduction <add>, %49, %cst [1, 2] : vector<1x2x128xf32> to vector<1xf32>
      %51 = vector.shape_cast %50 : vector<1xf32> to vector<1x1x1xf32>
      %52 = vector.extract %51[0, 0, 0] : f32 from vector<1x1x1xf32>
      %c0_33 = arith.constant 0 : index
      %c0_34 = arith.constant 0 : index
      %53 = vector.load %arg4[%c0_33, %c0_34] : memref<2x32xf32, #tpu.memory_space<vmem>>, vector<2x32xf32>
      %c0_35 = arith.constant 0 : index
      %c0_36 = arith.constant 0 : index
      %54 = vector.load %arg5[%c0_35, %c0_36] : memref<2x32xf32, #tpu.memory_space<vmem>>, vector<2x32xf32>
      %cst_37 = arith.constant 1.000000e+00 : f32
      %55 = vector.broadcast %cst_37 : f32 to vector<2x32xf32>
      %56 = arith.addf %55, %54 : vector<2x32xf32>
      %57 = arith.mulf %53, %53 : vector<2x32xf32>
      %58 = arith.subf %56, %57 : vector<2x32xf32>
      %59 = math.exp %54 : vector<2x32xf32>
      %60 = arith.subf %58, %59 : vector<2x32xf32>
      %61 = vector.shape_cast %60 : vector<2x32xf32> to vector<1x2x32xf32>
      %cst_38 = arith.constant dense<0.000000e+00> : vector<1xf32>
      %62 = vector.multi_reduction <add>, %61, %cst_38 [1, 2] : vector<1x2x32xf32> to vector<1xf32>
      %63 = vector.shape_cast %62 : vector<1xf32> to vector<1x1x1xf32>
      %64 = vector.extract %63[0, 0, 0] : f32 from vector<1x1x1xf32>
      %cst_39 = arith.constant -5.000000e-01 : f32
      %65 = arith.mulf %cst_39, %64 : f32
      %c0_i32_40 = arith.constant 0 : i32
      %66 = arith.cmpi eq, %arg0, %c0_i32_40 : i32
      %cst_41 = arith.constant 0.000000e+00 : f32
      %67 = arith.select %66, %65, %cst_41 : f32
      %68 = arith.addf %52, %67 : f32
      %69 = vector.broadcast %68 : f32 to vector<1x128xf32>
      %c0_42 = arith.constant 0 : index
      %c0_43 = arith.constant 0 : index
      %70 = vector.load %arg6[%c0_42, %c0_43] : memref<1x128xf32, #tpu.memory_space<vmem>>, vector<1x128xf32>
      tpu.vector_store %arg6[%c0_42, %c0_43], %69 {strides = array<i32>} : memref<1x128xf32, #tpu.memory_space<vmem>>, vector<1x128xf32>,
    } else {
    }
    return
  }
  func.func @transform_0(%arg0: i32, %arg1: i32) -> (i32, i32) {
    %c1_i32 = arith.constant 1 : i32
    %0 = arith.muli %arg0, %c1_i32 : i32
    %1 = arith.addi %0, %arg1 : i32
    %c0_i32 = arith.constant 0 : i32
    %c0_i32_0 = arith.constant 0 : i32
    return %c0_i32, %1 : i32, i32
  }
  func.func @transform_1(%arg0: i32, %arg1: i32) -> (i32, i32) {
    %c1_i32 = arith.constant 1 : i32
    %0 = arith.muli %arg0, %c1_i32 : i32
    %1 = arith.addi %0, %arg1 : i32
    %c0_i32 = arith.constant 0 : i32
    %c0_i32_0 = arith.constant 0 : i32
    return %c0_i32, %1 : i32, i32
  }
  func.func @transform_2(%arg0: i32, %arg1: i32) -> (i32, i32) {
    %c0_i32 = arith.constant 0 : i32
    %c0_i32_0 = arith.constant 0 : i32
    %c0_i32_1 = arith.constant 0 : i32
    return %c0_i32, %c0_i32_0 : i32, i32
  }
  func.func @transform_3(%arg0: i32, %arg1: i32) -> (i32, i32) {
    %c0_i32 = arith.constant 0 : i32
    %c0_i32_0 = arith.constant 0 : i32
    %c0_i32_1 = arith.constant 0 : i32
    return %c0_i32, %c0_i32_0 : i32, i32
  }
  func.func @transform_4(%arg0: i32, %arg1: i32) -> (i32, i32) {
    %c0_i32 = arith.constant 0 : i32
    %c0_i32_0 = arith.constant 0 : i32
    return %arg0, %c0_i32 : i32, i32
  }
}

</mosaic_0001>

<llo_original>
// kernel: tpu_custom_call.1
$region0: #{tpu_custom_call.1}
  #allocation0 [shape = 'u32[]', space=smem, size = 0x4, offset = 0x4, fixed_abs, tag = 'smem constant byte address 0x4 - core index']
  #allocation1 [shape = 'u32[72,128]{1,0:T(1,128)}', space=vmem, size = 0x9000, scoped, tag = 'internal scratch']
  #allocation2 [shape = 'f32[2,128]{1,0:T(2,128)}', space=vmem, size = 0x400, scoped, tag = 'scratch operand']
  %s0 = inlined_call_operand.hbm [shape: f32[2,1024], index: 0, kind: input, shape index: {}]
  %s1 = inlined_call_operand.hbm [shape: f32[2,1024], index: 1, kind: input, shape index: {}]
  %s2 = inlined_call_operand.hbm [shape: f32[2,32], index: 2, kind: input, shape index: {}]
  %s3 = inlined_call_operand.vmem [shape: f32[2,32], index: 3, kind: input, shape index: {}]
  %s4 = inlined_call_operand.hbm [shape: f32[1,128], index: 4, kind: output, shape index: {}]
  %s5 = sld [smem:[#allocation0]]
  $region46: #{tpu_custom_call.1} parent=0
    _
  %s7 = ssub.s32 1, %s5
  %s8 = scalar_select 0, %s7, %s5
  $region1: #{tpu_custom_call.1} parent=0
    #allocation3 [shape = 'u8[8192]{0}', space=vmem, size = 0x2000, scoped, tag = 'input window, operand 0, single buffered']
    #allocation4 [shape = 's32[1]{0}', space=sflag, size = 0x4, scoped, tag = 'scoped memory for tpu_custom_call.1']
    #allocation5 [shape = 's32[1]{0}', space=sflag, size = 0x4, scoped, tag = 'scoped memory for tpu_custom_call.1']
    #allocation6 [shape = 'u8[8192]{0}', space=vmem, size = 0x2000, scoped, tag = 'input window, operand 1, single buffered']
    #allocation7 [shape = 's32[1]{0}', space=sflag, size = 0x4, scoped, tag = 'scoped memory for tpu_custom_call.1']
    #allocation8 [shape = 'u8[1024]{0}', space=vmem, size = 0x400, scoped, tag = 'input window, operand 2, single buffered']
    #allocation9 [shape = 'u8[512]{0}', space=vmem, size = 0x400, scoped, tag = 'output window, operand 0, single buffered']
    %9 = vsyncpa [#allocation4], 0
    %10 = vsyncpa [#allocation7], 0
    %11 = vsyncpa [#allocation5], 0
    // Predicated region
    $region2: #{tpu_custom_call.1} parent=1 // pred_check
      _
    $region3: #{tpu_custom_call.1} parent=1 // pred_check_branch
      %13 = sbr.rel (0) target = $region5
    $region4: #{tpu_custom_call.1} parent=1 // pred_region
      %s14 = sadd.s32 0, 0
      %s15 = smul.u32 8, %s14
      %17 = vsyncadd [#allocation4], 0
      %s18 = smul.addr %s15, 2
      %s19 = scalar_lea.hbm %s0, %s18
      %s21 = sshll.u32 %s19, 4
      %s22 = int_to_ptr.hbm [resolvable:$true] %s21
      %s23 = sshll.u32 [#allocation3], 4
      %s24 = int_to_ptr.vmem [resolvable:$true] %s23
      %26 = dma.hbm_to_vmem [thread:$0]  %s22, 256, %s24, [#allocation4]
    $region5: #{tpu_custom_call.1} parent=1 // pred_fallthru
      _
    // Predicated region
    $region6: #{tpu_custom_call.1} parent=1 // pred_check
      _
    $region7: #{tpu_custom_call.1} parent=1 // pred_check_branch
      %28 = sbr.rel (0) target = $region9
    $region8: #{tpu_custom_call.1} parent=1 // pred_region
      %s29 = sadd.s32 0, 0
      %s30 = smul.u32 8, %s29
      %32 = vsyncadd [#allocation7], 0
      %s33 = smul.addr %s30, 2
      %s34 = scalar_lea.hbm %s1, %s33
      %s36 = sshll.u32 %s34, 4
      %s37 = int_to_ptr.hbm [resolvable:$true] %s36
      %s38 = sshll.u32 [#allocation6], 4
      %s39 = int_to_ptr.vmem [resolvable:$true] %s38
      %41 = dma.hbm_to_vmem [thread:$0]  %s37, 256, %s39, [#allocation7]
    $region9: #{tpu_custom_call.1} parent=1 // pred_fallthru
      _
    // Predicated region
    $region10: #{tpu_custom_call.1} parent=1 // pred_check
      _
    $region11: #{tpu_custom_call.1} parent=1 // pred_check_branch
      %43 = sbr.rel (0) target = $region13
    $region12: #{tpu_custom_call.1} parent=1 // pred_region
      %45 = vsyncadd [#allocation7], 0
      %s47 = sshll.u32 %s2, 4
      %s48 = int_to_ptr.hbm [resolvable:$true] %s47
      %s49 = sshll.u32 [#allocation8], 4
      %s50 = int_to_ptr.vmem [resolvable:$true] %s49
      %52 = dma.hbm_to_vmem [thread:$0]  %s48, 32, %s50, [#allocation7]
    $region13: #{tpu_custom_call.1} parent=1 // pred_fallthru
      _
    // Predicated region
    $region14: #{tpu_custom_call.1} parent=1 // pred_check
      _
    $region15: #{tpu_custom_call.1} parent=1 // pred_check_branch
      %54 = sbr.rel (0) target = $region17
    $region16: #{tpu_custom_call.1} parent=1 // pred_region
      _
    $region17: #{tpu_custom_call.1} parent=1 // pred_fallthru
      _
    // Predicated region
    $region18: #{tpu_custom_call.1} parent=1 // pred_check
      _
    $region19: #{tpu_custom_call.1} parent=1 // pred_check_branch
      %56 = sbr.rel (0) target = $region21
    $region20: #{tpu_custom_call.1} parent=1 // pred_region
      %58 = dma.done [#allocation4], 256
    $region21: #{tpu_custom_call.1} parent=1 // pred_fallthru
      _
    // Predicated region
    $region22: #{tpu_custom_call.1} parent=1 // pred_check
      _
    $region23: #{tpu_custom_call.1} parent=1 // pred_check_branch
      %60 = sbr.rel (0) target = $region25
    $region24: #{tpu_custom_call.1} parent=1 // pred_region
      %62 = dma.done [#allocation7], 256
    $region25: #{tpu_custom_call.1} parent=1 // pred_fallthru
      _
    // Predicated region
    $region26: #{tpu_custom_call.1} parent=1 // pred_check
      _
    $region27: #{tpu_custom_call.1} parent=1 // pred_check_branch
      %64 = sbr.rel (0) target = $region29
    $region28: #{tpu_custom_call.1} parent=1 // pred_region
      %66 = dma.done [#allocation7], 32
    $region29: #{tpu_custom_call.1} parent=1 // pred_fallthru
      _
    %s67 = sadd.s32 0, 0
    %s68 = smul.u32 8, %s67
    %s69 = sadd.s32 0, 0
    %s70 = smul.u32 8, %s69
    %p71 = scmp.eq.s32.totalorder 0, 0
    // Predicated region
    $region30: #{tpu_custom_call.1} parent=1 // pred_check
      %p72 = pneg %p71
    $region31: #{tpu_custom_call.1} parent=1 // pred_check_branch
      %74 = sbr.rel (%p72) target = $region33
    $region32: #{tpu_custom_call.1} parent=1 // pred_region
      %75 = vst [vmem:[#allocation2] sm:$0x3] 0.0
    $region33: #{tpu_custom_call.1} parent=1 // pred_fallthru
      _
    %v76 = vld [vmem:[#allocation3] sm:$0x3]
    %v77 = vld [vmem:[#allocation6] sm:$0x3]
    %v78 = vsub.f32 %v76, %v77
    %v79 = vmul.f32 %v78, %v78
    %v80 = vld [vmem:[#allocation3 + $0x2] sm:$0x3]
    %v81 = vld [vmem:[#allocation6 + $0x2] sm:$0x3]
    %v82 = vsub.f32 %v80, %v81
    %v83 = vmul.f32 %v82, %v82
    %v84 = vadd.f32 %v79, %v83
    %v85 = vld [vmem:[#allocation3 + $0x4] sm:$0x3]
    %v86 = vld [vmem:[#allocation6 + $0x4] sm:$0x3]
    %v87 = vsub.f32 %v85, %v86
    %v88 = vmul.f32 %v87, %v87
    %v89 = vadd.f32 %v84, %v88
    %v90 = vld [vmem:[#allocation3 + $0x6] sm:$0x3]
    %v91 = vld [vmem:[#allocation6 + $0x6] sm:$0x3]
    %v92 = vsub.f32 %v90, %v91
    %v93 = vmul.f32 %v92, %v92
    %v94 = vadd.f32 %v89, %v93
    %v95 = vld [vmem:[#allocation3 + $0x8] sm:$0x3]
    %v96 = vld [vmem:[#allocation6 + $0x8] sm:$0x3]
    %v97 = vsub.f32 %v95, %v96
    %v98 = vmul.f32 %v97, %v97
    %v99 = vadd.f32 %v94, %v98
    %v100 = vld [vmem:[#allocation3 + $0xa] sm:$0x3]
    %v101 = vld [vmem:[#allocation6 + $0xa] sm:$0x3]
    %v102 = vsub.f32 %v100, %v101
    %v103 = vmul.f32 %v102, %v102
    %v104 = vadd.f32 %v99, %v103
    %v105 = vld [vmem:[#allocation3 + $0xc] sm:$0x3]
    %v106 = vld [vmem:[#allocation6 + $0xc] sm:$0x3]
    %v107 = vsub.f32 %v105, %v106
    %v108 = vmul.f32 %v107, %v107
    %v109 = vadd.f32 %v104, %v108
    %v110 = vld [vmem:[#allocation3 + $0xe] sm:$0x3]
    %v111 = vld [vmem:[#allocation6 + $0xe] sm:$0x3]
    %v112 = vsub.f32 %v110, %v111
    %v113 = vmul.f32 %v112, %v112
    %v114 = vadd.f32 %v109, %v113
    %v115 = vld [vmem:[#allocation2] sm:$0x3]
    %v116 = vadd.f32 %v115, %v114
    %117 = vst [vmem:[#allocation2] sm:$0x3] %v116
    // Predicated region
    $region34: #{tpu_custom_call.1} parent=1 // pred_check
      %p118 = pneg %p71
    $region35: #{tpu_custom_call.1} parent=1 // pred_check_branch
      %120 = sbr.rel (%p118) target = $region37
    $region36: #{tpu_custom_call.1} parent=1 // pred_region
      %v121 = vld [vmem:[#allocation2] sm:$0x3]
      %vm122 = vcmask 1041408
      %v123 = vsel %vm122, %v121, 0.0
      %124 = vadd.xlane.f32.xlu0 %v123
      %v125 = vpop.xlane.xlu0 %124
      %v126 = vrot.slane %v125, 4
      %v127 = vadd.f32 %v125, %v126
      %v128 = vrot.slane %v127, 2
      %v129 = vadd.f32 %v127, %v128
      %v130 = vrot.slane %v129, 1
      %v131 = vadd.f32 %v129, %v130
      %s132 = vtos %v131
      %v133 = vld [vmem:[#allocation8] sm:$0x3]
      %v134 = vld [vmem:[%s3] sm:$0x3]
      %v135 = vadd.f32 %v134, 1.0
      %v136 = vmul.f32 %v133, %v133
      %v137 = vsub.f32 %v135, %v136
      %v138 = vmul.f32 %v134, 1.442695
      %v139 = vpow.pop %v138
      %v140 = vsub.f32 %v137, %v139
      %vm141 = vcmask 254976
      %v142 = vsel %vm141, %v140, 0.0
      %143 = vadd.xlane.f32.xlu0 %v142
      %v144 = vpop.xlane.xlu0 %143
      %v145 = vrot.slane %v144, 4
      %v146 = vadd.f32 %v144, %v145
      %v147 = vrot.slane %v146, 2
      %v148 = vadd.f32 %v146, %v147
      %v149 = vrot.slane %v148, 1
      %v150 = vadd.f32 %v148, %v149
      %s151 = vtos %v150
      %s152 = smul.f32 %s151, -0.5
      %p153 = scmp.eq.s32.totalorder 0, 0
      %s154 = scalar_select %p153, %s152, 0.0
      %s155 = sadd.f32 %s132, %s154
      %v156 = vstv %s155
      %157 = vst [vmem:[#allocation9] sm:$0x1] %v156
    $region37: #{tpu_custom_call.1} parent=1 // pred_fallthru
      _
    // Predicated region
    $region38: #{tpu_custom_call.1} parent=1 // pred_check
      _
    $region39: #{tpu_custom_call.1} parent=1 // pred_check_branch
      %159 = sbr.rel (0) target = $region41
    $region40: #{tpu_custom_call.1} parent=1 // pred_region
      %161 = vsyncadd [#allocation5], 0
      %s163 = sshll.u32 [#allocation9], 4
      %s164 = int_to_ptr.vmem [resolvable:$true] %s163
      %s165 = sshll.u32 %s4, 4
      %s166 = int_to_ptr.hbm [resolvable:$true] %s165
      %168 = dma.vmem_to_hbm [thread:$0]  %s164, 16, %s166, [#allocation5]
    $region41: #{tpu_custom_call.1} parent=1 // pred_fallthru
      _
    // Predicated region
    $region42: #{tpu_custom_call.1} parent=1 // pred_check
      _
    $region43: #{tpu_custom_call.1} parent=1 // pred_check_branch
      %170 = sbr.rel (0) target = $region45
    $region44: #{tpu_custom_call.1} parent=1 // pred_region
      %172 = dma.done [#allocation5], 16
    $region45: #{tpu_custom_call.1} parent=1 // pred_fallthru
      _
    %173 = vsyncpa [#allocation4], 1
    %174 = vsyncpa [#allocation7], 1
    %175 = vsyncpa [#allocation5], 1

</llo_original>
